<compile_context>
chip_gen: v7x
topology: tpu7x:2x2x1
jax: 0.10.0
libtpu: 0.0.40
codegen_flags: <defaults>
</compile_context>

<pallas_src>
import jax
import jax.numpy as jnp
from jax.experimental import pallas as pl
from jax.experimental.pallas import tpu as pltpu


def _linear_kernel(x_ref, w_ref, b_ref, o_ref):
    """One batch tile of y = x @ W^T + b for Linear(out_features=1).

    x_ref: (TB, W) f32 VMEM  -- batch tile of the (possibly K-flattened) input
    w_ref: (1, W)  f32 VMEM  -- weight row (sublane-broadcast in the multiply)
    b_ref: (1,)    f32 SMEM  -- scalar bias
    o_ref: (TB, 1) f32 VMEM
    """
    # VPU multiply + XLU lane reduction; no MXU involvement for N=1.
    acc = jnp.sum(x_ref[...] * w_ref[...], axis=-1, keepdims=True)
    o_ref[...] = (acc + b_ref[0]).astype(o_ref.dtype)


def _vmem_capacity_bytes():
    """Physical VMEM per TensorCore; conservative fallback if query fails."""
    try:
        return int(pltpu.get_tpu_info().vmem_capacity_bytes)
    except Exception:
        return 64 * 1024 * 1024  # v7x per-TC size: safe lower bound everywhere


def _pick_batch_tile(batch, row_bytes, per_buffer_budget_bytes):
    """Largest batch tile whose (double-buffered) x block fits the budget,
    while keeping >= 4 grid steps for large B so v7x's 2 TCs both get work."""
    if batch <= 8:
        # Full-extent block is exempt from the (8, 128) divisibility rule.
        return batch
    tb = per_buffer_budget_bytes // max(row_bytes, 1)
    tb = min(tb, batch)
    min_steps = 4
    if batch >= min_steps * 8:
        tb = min(tb, pl.cdiv(batch, min_steps))
    return max(8, (tb // 8) * 8)  # multiple of 8 sublanes


def dummy_model_forward(x, w, b, *, fuse_slice_max_k=8):
    """x: (B, D, K) f32; w: (1, D) f32; b: (1,) f32.
    Returns (B, 1) f32 == LazyLinear(1)(x[..., 0])."""
    x = x.astype(jnp.float32)
    B, D, K = x.shape
    w = w.reshape(1, D).astype(jnp.float32)
    b_vec = b.reshape(1).astype(jnp.float32)  # scalar bias -> SMEM

    if K <= fuse_slice_max_k:
        # Fused slice: view x as (B, D*K) (free reshape, one HBM pass) and use
        # a zero-interleaved weight row so lanes d*K carry w, the rest 0.
        x2 = x.reshape(B, D * K)
        w_col = w.reshape(D, 1)
        if K > 1:
            w_row = jnp.pad(w_col, ((0, 0), (0, K - 1))).reshape(1, D * K)
        else:
            w_row = w_col.reshape(1, D)
        W_total = D * K
    else:
        # Large K: a strided wrapper slice skips HBM bursts; keep it outside.
        x2 = x[..., 0]                      # (B, D)
        w_row = w                           # (1, D)
        W_total = D

    row_bytes = W_total * 4
    vmem_cap = _vmem_capacity_bytes()
    # Per-buffer x block target: 4-16 MiB (amortizes ~0.35 us/step overhead),
    # gated by the generation's physical VMEM (64 MiB/TC on v7x).
    per_buffer_budget = min(16 * 1024 * 1024, int(0.25 * vmem_cap))
    tb = _pick_batch_tile(B, row_bytes, per_buffer_budget)
    grid = (pl.cdiv(B, tb),)

    # VMEM actually needed: 2x x block, 2x lane-padded out block, weight, slack.
    x_block_bytes = tb * row_bytes
    out_block_bytes = tb * 128 * 4          # (tb, 1) pads the lane dim to 128
    w_bytes = 8 * W_total * 4               # (1, W) pads the sublane dim to 8
    needed = 2 * x_block_bytes + 2 * out_block_bytes + w_bytes + (4 << 20)
    vmem_limit = max(needed, 32 << 20)
    vmem_limit = min(vmem_limit, vmem_cap - (8 << 20))

    cost = pl.CostEstimate(
        flops=2 * B * W_total,
        transcendentals=0,
        bytes_accessed=B * W_total * 4 + B * 4 + W_total * 4,
    )

    out = pl.pallas_call(
        _linear_kernel,
        out_shape=jax.ShapeDtypeStruct((B, 1), jnp.float32),
        grid_spec=pltpu.PrefetchScalarGridSpec(
            num_scalar_prefetch=0,
            grid=grid,
            in_specs=[
                # Batch-tiled input: (tb, W) block, pipelined over the grid.
                pl.BlockSpec((tb, W_total), lambda i: (i, 0)),
                # Weight row: same (1, W) block every step (stays resident).
                pl.BlockSpec((1, W_total), lambda i: (0, 0)),
                # Bias scalar: whole (1,) array in SMEM, no VMEM tile / DMA.
                pl.BlockSpec(memory_space=pltpu.MemorySpace.SMEM),
            ],
            out_specs=pl.BlockSpec((tb, 1), lambda i: (i, 0)),
        ),
        compiler_params=pltpu.CompilerParams(
            # Batch tiles are independent -> megacore-shardable on v7x.
            dimension_semantics=("parallel",),
            vmem_limit_bytes=int(vmem_limit),
        ),
        cost_estimate=cost,
    )(x2, w_row, b_vec)
    return out


def _reference(x, w, b):
    return x[..., 0].astype(jnp.float32) @ w.T + b


def _check(x, w, b):
    y = jax.block_until_ready(dummy_model_forward(x, w, b))
    y_ref = _reference(x, w, b)
    assert y.shape == (x.shape[0], 1), y.shape
    assert jnp.allclose(y, y_ref, atol=1e-4, rtol=1e-4), (
        float(jnp.max(jnp.abs(y - y_ref))))
    return y


if __name__ == "__main__":
    key = jax.random.PRNGKey(0)
    k_x, k_w, k_b, k_x2, k_x3 = jax.random.split(key, 5)

    # --- Small shapes consistent with the forward: batch=2, features=32, K=4.
    B, D, K = 2, 32, 4
    x = jax.random.normal(k_x, (B, D, K), dtype=jnp.float32)
    bound = 1.0 / jnp.sqrt(jnp.float32(D))
    w = jax.random.uniform(k_w, (1, D), dtype=jnp.float32, minval=-bound, maxval=bound)
    b = jax.random.uniform(k_b, (1,), dtype=jnp.float32, minval=-bound, maxval=bound)
    _check(x, w, b)

    # --- Larger run exercising the tiled / pipelined fused-slice path with a
    #     partial last batch tile (B % tb != 0).
    B2, D2 = 2050, 128
    x2 = jax.random.normal(k_x2, (B2, D2, K), dtype=jnp.float32)
    bound2 = 1.0 / jnp.sqrt(jnp.float32(D2))
    w2 = jax.random.uniform(k_w, (1, D2), dtype=jnp.float32, minval=-bound2, maxval=bound2)
    b2 = jax.random.uniform(k_b, (1,), dtype=jnp.float32, minval=-bound2, maxval=bound2)
    _check(x2, w2, b2)

    # --- Large-K case exercising the wrapper-slice fallback path.
    B3, D3, K3 = 64, 32, 16
    x3 = jax.random.normal(k_x3, (B3, D3, K3), dtype=jnp.float32)
    bound3 = 1.0 / jnp.sqrt(jnp.float32(D3))
    w3 = jax.random.uniform(k_w, (1, D3), dtype=jnp.float32, minval=-bound3, maxval=bound3)
    b3 = jax.random.uniform(k_b, (1,), dtype=jnp.float32, minval=-bound3, maxval=bound3)
    _check(x3, w3, b3)

    print("KERNEL_OK")
</pallas_src>

<mosaic_0001>
module attributes {stable_mosaic.version = 11 : i64} {
  func.func @_linear_kernel(%arg0: i32, %arg1: memref<2x128xf32, #tpu.memory_space<vmem>>, %arg2: memref<1x128xf32, #tpu.memory_space<vmem>>, %arg3: memref<1xf32, #tpu.memory_space<smem>>, %arg4: memref<2x1xf32, #tpu.memory_space<vmem>>) attributes {dimension_semantics = [#tpu.dimension_semantics<parallel>], iteration_bounds = array<i64: 1>, scalar_prefetch = 0 : i64, scratch_operands = 0 : i64, tpu.core_type = #tpu.core_type<tc>, window_params = [{transform_indices = @transform_0, window_bounds = array<i64: 2, 128>}, {pipeline_mode = #tpu.pipeline_mode<synchronous>, transform_indices = @transform_1, window_bounds = array<i64: 1, 128>}, {transform_indices = @transform_2, window_bounds = array<i64: 1>}, {transform_indices = @transform_3, window_bounds = array<i64: 2, 1>}]} {
    %c0 = arith.constant 0 : index
    %c0_0 = arith.constant 0 : index
    %0 = vector.load %arg1[%c0, %c0_0] : memref<2x128xf32, #tpu.memory_space<vmem>>, vector<2x128xf32>
    %c0_1 = arith.constant 0 : index
    %c0_2 = arith.constant 0 : index
    %1 = vector.load %arg2[%c0_1, %c0_2] : memref<1x128xf32, #tpu.memory_space<vmem>>, vector<1x128xf32>
    %2 = vector.broadcast %1 : vector<1x128xf32> to vector<2x128xf32>
    %3 = arith.mulf %0, %2 : vector<2x128xf32>
    %cst = arith.constant dense<0.000000e+00> : vector<2xf32>
    %4 = vector.multi_reduction <add>, %3, %cst [1] : vector<2x128xf32> to vector<2xf32>
    %5 = vector.shape_cast %4 : vector<2xf32> to vector<2x1xf32>
    %c0_3 = arith.constant 0 : index
    %6 = memref.load %arg3[%c0_3] : memref<1xf32, #tpu.memory_space<smem>>
    %7 = vector.broadcast %6 : f32 to vector<2x1xf32>
    %8 = arith.addf %5, %7 : vector<2x1xf32>
    %c0_4 = arith.constant 0 : index
    %c0_5 = arith.constant 0 : index
    %9 = vector.load %arg4[%c0_4, %c0_5] : memref<2x1xf32, #tpu.memory_space<vmem>>, vector<2x1xf32>
    tpu.vector_store %arg4[%c0_4, %c0_5], %8 {strides = array<i32>} : memref<2x1xf32, #tpu.memory_space<vmem>>, vector<2x1xf32>,
    return
  }
  func.func @transform_0(%arg0: i32) -> (i32, i32) {
    %c0_i32 = arith.constant 0 : i32
    %c0_i32_0 = arith.constant 0 : i32
    return %arg0, %c0_i32 : i32, i32
  }
  func.func @transform_1(%arg0: i32) -> (i32, i32) {
    %c0_i32 = arith.constant 0 : i32
    %c0_i32_0 = arith.constant 0 : i32
    %c0_i32_1 = arith.constant 0 : i32
    return %c0_i32, %c0_i32_0 : i32, i32
  }
  func.func @transform_2(%arg0: i32) -> i32 {
    %c0_i32 = arith.constant 0 : i32
    %c0_i32_0 = arith.constant 0 : i32
    return %c0_i32 : i32
  }
  func.func @transform_3(%arg0: i32) -> (i32, i32) {
    %c0_i32 = arith.constant 0 : i32
    %c0_i32_0 = arith.constant 0 : i32
    return %arg0, %c0_i32 : i32, i32
  }
}

</mosaic_0001>

<llo_original>
// kernel: tpu_custom_call.1
$region0: #{tpu_custom_call.1}
  #allocation0 [shape = 'u32[]', space=smem, size = 0x4, offset = 0x4, fixed_abs, tag = 'smem constant byte address 0x4 - core index']
  #allocation1 [shape = 'u32[144,128]{1,0:T(1,128)}', space=vmem, size = 0x12000, scoped, tag = 'internal scratch']
  #allocation2 [shape = 'f32[1]{0:T(128)S(6)}', space=smem, size = 0x200, scoped, tag = 'scoped memory for tpu_custom_call.1']
  %s0 = inlined_call_operand.vmem [shape: f32[2,128], index: 0, kind: input, shape index: {}]
  %s1 = inlined_call_operand.vmem [shape: f32[1,128], index: 1, kind: input, shape index: {}]
  %s2 = inlined_call_operand.<no memory space> [shape: f32[1], index: 2, kind: input, shape index: {}]
  %s3 = inlined_call_operand.vmem [shape: f32[2,1], index: 3, kind: output, shape index: {}]
  %s4 = sld [smem:[#allocation0]]
  $region22: #{tpu_custom_call.1} parent=0
    _
  %s6 = ssub.s32 1, %s4
  %s7 = scalar_select 0, %s6, %s4
  %8 = sst [smem:[#allocation2]] %s2
  // Predicated region
  $region2: #{tpu_custom_call.1} parent=0 // pred_check
    _
  $region3: #{tpu_custom_call.1} parent=0 // pred_check_branch
    %10 = sbr.rel (0) target = $region5
  $region4: #{tpu_custom_call.1} parent=0 // pred_region
    _
  $region5: #{tpu_custom_call.1} parent=0 // pred_fallthru
    _
  // Predicated region
  $region6: #{tpu_custom_call.1} parent=0 // pred_check
    _
  $region7: #{tpu_custom_call.1} parent=0 // pred_check_branch
    %12 = sbr.rel (0) target = $region9
  $region8: #{tpu_custom_call.1} parent=0 // pred_region
    _
  $region9: #{tpu_custom_call.1} parent=0 // pred_fallthru
    _
  // Predicated region
  $region10: #{tpu_custom_call.1} parent=0 // pred_check
    _
  $region11: #{tpu_custom_call.1} parent=0 // pred_check_branch
    %14 = sbr.rel (0) target = $region13
  $region12: #{tpu_custom_call.1} parent=0 // pred_region
    _
  $region13: #{tpu_custom_call.1} parent=0 // pred_fallthru
    _
  %v15 = vld [vmem:[%s0] sm:$0x3]
  %v16 = vld [vmem:[%s1] sm:$0x1]
  %v18 = vlaneseq
  %v19 = vshrl.u32 %v18, 7
  %v20 = vsub.s32 0, %v19
  %v21 = vrot.slane %v16, %v20
  %v23 = vmul.f32 %v15, %v21
  %vm24 = vcmask 1041408
  %v25 = vsel %vm24, %v23, 0.0
  %26 = vadd.xlane.f32.xlu0 %v25
  %v27 = vpop.xlane.xlu0 %26
  %s28 = sld [smem:[#allocation2]]
  %v29 = vstv %s28
  %v30 = vadd.f32 %v27, %v29
  %vm31 = vcmask 1024
  %32 = vst.msk [vmem:[%s3] sm:$0x3] %vm31, %v30
  // Predicated region
  $region14: #{tpu_custom_call.1} parent=0 // pred_check
    _
  $region15: #{tpu_custom_call.1} parent=0 // pred_check_branch
    %34 = sbr.rel (0) target = $region17
  $region16: #{tpu_custom_call.1} parent=0 // pred_region
    _
  $region17: #{tpu_custom_call.1} parent=0 // pred_fallthru
    _
  // Predicated region
  $region18: #{tpu_custom_call.1} parent=0 // pred_check
    _
  $region19: #{tpu_custom_call.1} parent=0 // pred_check_branch
    %36 = sbr.rel (0) target = $region21
  $region20: #{tpu_custom_call.1} parent=0 // pred_region
    _
  $region21: #{tpu_custom_call.1} parent=0 // pred_fallthru
    _

</llo_original>
